<compile_context>
chip_gen: v7x
topology: tpu7x:2x2x1
jax: 0.10.0
libtpu: 0.0.40
codegen_flags: <defaults>
</compile_context>

<pallas_src>
import functools

import jax
import jax.numpy as jnp
from jax.experimental import pallas as pl
from jax.experimental.pallas import tpu as pltpu

_LANE = 128      # vreg lane width  (last dim)
_SUBLANE = 8     # vreg sublane width (second-to-last dim)


def _round_up(n, m):
    return (n + m - 1) // m * m


def feedforward_kernel(x_ref, w1_ref, b1_ref, w2_ref, b2_ref, o_ref):
    # Linear 1: [TB, Dp] @ [Dp, Hp]  (weights already [in, out]; no transpose).
    h = jnp.dot(x_ref[...], w1_ref[...], preferred_element_type=jnp.float32)
    h = h + b1_ref[...]            # bias + ReLU in f32 (v5e: no bf16 VPU path)
    h = jnp.maximum(h, 0.0)
    # Dropout (eval mode) -> identity.
    # Linear 2: [TB, Hp] @ [Hp, Cp]
    h = h.astype(w2_ref.dtype)     # back to the MXU operand dtype (bf16/f32)
    out = jnp.dot(h, w2_ref[...], preferred_element_type=jnp.float32)
    out = out + b2_ref[...]
    o_ref[...] = out.astype(o_ref.dtype)   # lane-dense (padded) store


@functools.partial(jax.jit, static_argnames=("block_b", "compute_dtype"))
def feedforward(x, w1, b1, w2, b2, *, block_b=512, compute_dtype=jnp.bfloat16):
    """y = relu(x @ w1.T + b1) @ w2.T + b2   (dropout in eval mode == identity).

    PyTorch layout: x [..., D_in]; w1 [H, D_in]; b1 [H]; w2 [C, H]; b2 [C].
    """
    *lead, D_in = x.shape
    H = w1.shape[0]
    C = w2.shape[0]
    out_dtype = x.dtype

    # Flatten leading dims to a single batch dim (nn.Linear semantics).
    x2 = x.reshape(-1, D_in)
    B = x2.shape[0]

    # Lane-dense padded feature dims (multiples of the 128-lane vreg width).
    Dp = _round_up(D_in, _LANE)
    Hp = _round_up(H, _LANE)
    Cp = _round_up(C, _LANE)

    # Batch tile: as large as requested, multiple of 8 (sublanes), grid-divisible.
    TB = min(block_b, _round_up(B, _SUBLANE))
    Bp = _round_up(B, TB)

    # Pre-transpose weights to [in, out] and zero-pad once, outside the kernel.
    # Zero padding along the contraction dims keeps the matmuls exact.
    w1_t = jnp.zeros((Dp, Hp), compute_dtype).at[:D_in, :H].set(
        w1.T.astype(compute_dtype))
    w2_t = jnp.zeros((Hp, Cp), compute_dtype).at[:H, :C].set(
        w2.T.astype(compute_dtype))
    b1_p = jnp.zeros((1, Hp), jnp.float32).at[:, :H].set(
        jnp.asarray(b1, jnp.float32).reshape(1, H))
    b2_p = jnp.zeros((1, Cp), jnp.float32).at[:, :C].set(
        jnp.asarray(b2, jnp.float32).reshape(1, C))

    # Stream activations in compute_dtype (halves HBM traffic when bf16);
    # cast + pad fused into one pass over x.
    x_p = jnp.zeros((Bp, Dp), compute_dtype).at[:B, :D_in].set(
        x2.astype(compute_dtype))

    grid = (Bp // TB,)
    out_p = pl.pallas_call(
        feedforward_kernel,
        out_shape=jax.ShapeDtypeStruct((Bp, Cp), out_dtype),
        grid=grid,
        in_specs=[
            pl.BlockSpec((TB, Dp), lambda i: (i, 0)),   # streamed activation tile
            pl.BlockSpec((Dp, Hp), lambda i: (0, 0)),   # resident W1 (fetched once)
            pl.BlockSpec((1, Hp), lambda i: (0, 0)),    # resident b1
            pl.BlockSpec((Hp, Cp), lambda i: (0, 0)),   # resident W2
            pl.BlockSpec((1, Cp), lambda i: (0, 0)),    # resident b2
        ],
        out_specs=pl.BlockSpec((TB, Cp), lambda i: (i, 0)),  # lane-dense store
        compiler_params=pltpu.CompilerParams(
            dimension_semantics=("parallel",),   # batch tiles shard across TCs
            vmem_limit_bytes=32 << 20,
        ),
    )(x_p, w1_t, b1_p, w2_t, b2_p)

    # Strip batch / feature padding and restore leading dims.
    return out_p[:B, :C].reshape(*lead, C)


def init_linear_params(key, in_features, out_features, dtype=jnp.float32):
    # Deterministic init mimicking nn.Linear's uniform(-1/sqrt(in), 1/sqrt(in)).
    kw, kb = jax.random.split(key)
    bound = 1.0 / (in_features ** 0.5)
    w = jax.random.uniform(kw, (out_features, in_features), dtype,
                           minval=-bound, maxval=bound)
    b = jax.random.uniform(kb, (out_features,), dtype,
                           minval=-bound, maxval=bound)
    return w, b


if __name__ == "__main__":
    B, D_in, H, C = 256, 32, 64, 16

    key = jax.random.PRNGKey(0)
    kx, k1, k2 = jax.random.split(key, 3)

    x = jax.random.normal(kx, (B, D_in), jnp.float32)
    w1, b1 = init_linear_params(k1, D_in, H)
    w2, b2 = init_linear_params(k2, H, C)

    # Plain-JAX reference (eval-mode dropout == identity).
    ref = jnp.maximum(x @ w1.T + b1[None, :], 0.0) @ w2.T + b2[None, :]

    # f32 path, single grid step (tight numerical check).
    out_f32 = jax.block_until_ready(
        feedforward(x, w1, b1, w2, b2, compute_dtype=jnp.float32))
    assert out_f32.shape == (B, C)
    assert jnp.allclose(out_f32, ref, atol=1e-4, rtol=1e-4)

    # bf16-MXU path with a multi-step batch grid (loose check vs f32 reference).
    out_bf16 = jax.block_until_ready(
        feedforward(x, w1, b1, w2, b2, block_b=128, compute_dtype=jnp.bfloat16))
    assert out_bf16.shape == (B, C)
    assert jnp.allclose(out_bf16, ref, atol=5e-2, rtol=5e-2)

    print("KERNEL_OK")
</pallas_src>

<mosaic_0001>
module attributes {stable_mosaic.version = 11 : i64} {
  func.func @feedforward_kernel(%arg0: i32, %arg1: memref<256x128xf32, #tpu.memory_space<vmem>>, %arg2: memref<128x128xf32, #tpu.memory_space<vmem>>, %arg3: memref<1x128xf32, #tpu.memory_space<vmem>>, %arg4: memref<128x128xf32, #tpu.memory_space<vmem>>, %arg5: memref<1x128xf32, #tpu.memory_space<vmem>>, %arg6: memref<256x128xf32, #tpu.memory_space<vmem>>) attributes {dimension_semantics = [#tpu.dimension_semantics<parallel>], iteration_bounds = array<i64: 1>, scalar_prefetch = 0 : i64, scratch_operands = 0 : i64, tpu.core_type = #tpu.core_type<tc>, window_params = [{transform_indices = @transform_0, window_bounds = array<i64: 256, 128>}, {pipeline_mode = #tpu.pipeline_mode<synchronous>, transform_indices = @transform_1, window_bounds = array<i64: 128, 128>}, {pipeline_mode = #tpu.pipeline_mode<synchronous>, transform_indices = @transform_2, window_bounds = array<i64: 1, 128>}, {pipeline_mode = #tpu.pipeline_mode<synchronous>, transform_indices = @transform_3, window_bounds = array<i64: 128, 128>}, {pipeline_mode = #tpu.pipeline_mode<synchronous>, transform_indices = @transform_4, window_bounds = array<i64: 1, 128>}, {transform_indices = @transform_5, window_bounds = array<i64: 256, 128>}]} {
    %c0 = arith.constant 0 : index
    %c0_0 = arith.constant 0 : index
    %0 = vector.load %arg1[%c0, %c0_0] : memref<256x128xf32, #tpu.memory_space<vmem>>, vector<256x128xf32>
    %c0_1 = arith.constant 0 : index
    %c0_2 = arith.constant 0 : index
    %1 = vector.load %arg2[%c0_1, %c0_2] : memref<128x128xf32, #tpu.memory_space<vmem>>, vector<128x128xf32>
    %cst = arith.constant dense<0.000000e+00> : vector<256x128xf32>
    %2 = tpu.matmul %0, %1, %cst {dimension_numbers = #tpu.dot_dimension_numbers<[1], [0], [0], [1], [0, 0, 1, 1], [], []>} : vector<256x128xf32>, vector<128x128xf32>, vector<256x128xf32> -> vector<256x128xf32>
    %c0_3 = arith.constant 0 : index
    %c0_4 = arith.constant 0 : index
    %3 = vector.load %arg3[%c0_3, %c0_4] : memref<1x128xf32, #tpu.memory_space<vmem>>, vector<1x128xf32>
    %4 = vector.broadcast %3 : vector<1x128xf32> to vector<256x128xf32>
    %5 = arith.addf %2, %4 : vector<256x128xf32>
    %cst_5 = arith.constant 0.000000e+00 : f32
    %6 = vector.broadcast %cst_5 : f32 to vector<256x128xf32>
    %7 = arith.maximumf %5, %6 : vector<256x128xf32>
    %c0_6 = arith.constant 0 : index
    %c0_7 = arith.constant 0 : index
    %8 = vector.load %arg4[%c0_6, %c0_7] : memref<128x128xf32, #tpu.memory_space<vmem>>, vector<128x128xf32>
    %cst_8 = arith.constant dense<0.000000e+00> : vector<256x128xf32>
    %9 = tpu.matmul %7, %8, %cst_8 {dimension_numbers = #tpu.dot_dimension_numbers<[1], [0], [0], [1], [0, 0, 1, 1], [], []>} : vector<256x128xf32>, vector<128x128xf32>, vector<256x128xf32> -> vector<256x128xf32>
    %c0_9 = arith.constant 0 : index
    %c0_10 = arith.constant 0 : index
    %10 = vector.load %arg5[%c0_9, %c0_10] : memref<1x128xf32, #tpu.memory_space<vmem>>, vector<1x128xf32>
    %11 = vector.broadcast %10 : vector<1x128xf32> to vector<256x128xf32>
    %12 = arith.addf %9, %11 : vector<256x128xf32>
    %c0_11 = arith.constant 0 : index
    %c0_12 = arith.constant 0 : index
    %13 = vector.load %arg6[%c0_11, %c0_12] : memref<256x128xf32, #tpu.memory_space<vmem>>, vector<256x128xf32>
    tpu.vector_store %arg6[%c0_11, %c0_12], %12 {strides = array<i32>} : memref<256x128xf32, #tpu.memory_space<vmem>>, vector<256x128xf32>,
    return
  }
  func.func @transform_0(%arg0: i32) -> (i32, i32) {
    %c0_i32 = arith.constant 0 : i32
    %c0_i32_0 = arith.constant 0 : i32
    return %arg0, %c0_i32 : i32, i32
  }
  func.func @transform_1(%arg0: i32) -> (i32, i32) {
    %c0_i32 = arith.constant 0 : i32
    %c0_i32_0 = arith.constant 0 : i32
    %c0_i32_1 = arith.constant 0 : i32
    return %c0_i32, %c0_i32_0 : i32, i32
  }
  func.func @transform_2(%arg0: i32) -> (i32, i32) {
    %c0_i32 = arith.constant 0 : i32
    %c0_i32_0 = arith.constant 0 : i32
    %c0_i32_1 = arith.constant 0 : i32
    return %c0_i32, %c0_i32_0 : i32, i32
  }
  func.func @transform_3(%arg0: i32) -> (i32, i32) {
    %c0_i32 = arith.constant 0 : i32
    %c0_i32_0 = arith.constant 0 : i32
    %c0_i32_1 = arith.constant 0 : i32
    return %c0_i32, %c0_i32_0 : i32, i32
  }
  func.func @transform_4(%arg0: i32) -> (i32, i32) {
    %c0_i32 = arith.constant 0 : i32
    %c0_i32_0 = arith.constant 0 : i32
    %c0_i32_1 = arith.constant 0 : i32
    return %c0_i32, %c0_i32_0 : i32, i32
  }
  func.func @transform_5(%arg0: i32) -> (i32, i32) {
    %c0_i32 = arith.constant 0 : i32
    %c0_i32_0 = arith.constant 0 : i32
    return %arg0, %c0_i32 : i32, i32
  }
}

</mosaic_0001>

<llo_original>
// kernel: feedforward.1
$region0: #{feedforward.1}
  #allocation0 [shape = 'u32[]', space=smem, size = 0x4, offset = 0x4, fixed_abs, tag = 'smem constant byte address 0x4 - core index']
  #allocation1 [shape = 'u32[144,128]{1,0:T(1,128)}', space=vmem, size = 0x12000, scoped, tag = 'internal scratch']
  %s0 = inlined_call_operand.vmem [shape: f32[256,128], index: 0, kind: input, shape index: {}]
  %s1 = inlined_call_operand.vmem [shape: f32[128,128], index: 1, kind: input, shape index: {}]
  %s2 = inlined_call_operand.vmem [shape: f32[1,128], index: 2, kind: input, shape index: {}]
  %s3 = inlined_call_operand.vmem [shape: f32[128,128], index: 3, kind: input, shape index: {}]
  %s4 = inlined_call_operand.vmem [shape: f32[1,128], index: 4, kind: input, shape index: {}]
  %s5 = inlined_call_operand.vmem [shape: f32[256,128], index: 5, kind: output, shape index: {}]
  %s6 = sld [smem:[#allocation0]]
  $region30: #{feedforward.1} parent=0
    _
  %s8 = ssub.s32 1, %s6
  %s9 = scalar_select 0, %s8, %s6
  // Predicated region
  $region2: #{feedforward.1} parent=0 // pred_check
    _
  $region3: #{feedforward.1} parent=0 // pred_check_branch
    %11 = sbr.rel (0) target = $region5
  $region4: #{feedforward.1} parent=0 // pred_region
    _
  $region5: #{feedforward.1} parent=0 // pred_fallthru
    _
  // Predicated region
  $region6: #{feedforward.1} parent=0 // pred_check
    _
  $region7: #{feedforward.1} parent=0 // pred_check_branch
    %13 = sbr.rel (0) target = $region9
  $region8: #{feedforward.1} parent=0 // pred_region
    _
  $region9: #{feedforward.1} parent=0 // pred_fallthru
    _
  // Predicated region
  $region10: #{feedforward.1} parent=0 // pred_check
    _
  $region11: #{feedforward.1} parent=0 // pred_check_branch
    %15 = sbr.rel (0) target = $region13
  $region12: #{feedforward.1} parent=0 // pred_region
    _
  $region13: #{feedforward.1} parent=0 // pred_fallthru
    _
  // Predicated region
  $region14: #{feedforward.1} parent=0 // pred_check
    _
  $region15: #{feedforward.1} parent=0 // pred_check_branch
    %17 = sbr.rel (0) target = $region17
  $region16: #{feedforward.1} parent=0 // pred_region
    _
  $region17: #{feedforward.1} parent=0 // pred_fallthru
    _
  // Predicated region
  $region18: #{feedforward.1} parent=0 // pred_check
    _
  $region19: #{feedforward.1} parent=0 // pred_check_branch
    %19 = sbr.rel (0) target = $region21
  $region20: #{feedforward.1} parent=0 // pred_region
    _
  $region21: #{feedforward.1} parent=0 // pred_fallthru
    _
  %v20 = vld [vmem:[%s0] sm:$0xff]
  %v21 = vld [vmem:[%s0 + $0x8] sm:$0xff]
  %v22 = vld [vmem:[%s0 + $0x10] sm:$0xff]
  %v23 = vld [vmem:[%s0 + $0x18] sm:$0xff]
  %v24 = vld [vmem:[%s0 + $0x20] sm:$0xff]
  %v25 = vld [vmem:[%s0 + $0x28] sm:$0xff]
  %v26 = vld [vmem:[%s0 + $0x30] sm:$0xff]
  %v27 = vld [vmem:[%s0 + $0x38] sm:$0xff]
  %v28 = vld [vmem:[%s0 + $0x40] sm:$0xff]
  %v29 = vld [vmem:[%s0 + $0x48] sm:$0xff]
  %v30 = vld [vmem:[%s0 + $0x50] sm:$0xff]
  %v31 = vld [vmem:[%s0 + $0x58] sm:$0xff]
  %v32 = vld [vmem:[%s0 + $0x60] sm:$0xff]
  %v33 = vld [vmem:[%s0 + $0x68] sm:$0xff]
  %v34 = vld [vmem:[%s0 + $0x70] sm:$0xff]
  %v35 = vld [vmem:[%s0 + $0x78] sm:$0xff]
  %v36 = vld [vmem:[%s0 + $0x80] sm:$0xff]
  %v37 = vld [vmem:[%s0 + $0x88] sm:$0xff]
  %v38 = vld [vmem:[%s0 + $0x90] sm:$0xff]
  %v39 = vld [vmem:[%s0 + $0x98] sm:$0xff]
  %v40 = vld [vmem:[%s0 + $0xa0] sm:$0xff]
  %v41 = vld [vmem:[%s0 + $0xa8] sm:$0xff]
  %v42 = vld [vmem:[%s0 + $0xb0] sm:$0xff]
  %v43 = vld [vmem:[%s0 + $0xb8] sm:$0xff]
  %v44 = vld [vmem:[%s0 + $0xc0] sm:$0xff]
  %v45 = vld [vmem:[%s0 + $0xc8] sm:$0xff]
  %v46 = vld [vmem:[%s0 + $0xd0] sm:$0xff]
  %v47 = vld [vmem:[%s0 + $0xd8] sm:$0xff]
  %v48 = vld [vmem:[%s0 + $0xe0] sm:$0xff]
  %v49 = vld [vmem:[%s0 + $0xe8] sm:$0xff]
  %v50 = vld [vmem:[%s0 + $0xf0] sm:$0xff]
  %v51 = vld [vmem:[%s0 + $0xf8] sm:$0xff]
  %v52 = vld [vmem:[%s1] sm:$0xff]
  %v53 = vld [vmem:[%s1 + $0x8] sm:$0xff]
  %v54 = vld [vmem:[%s1 + $0x10] sm:$0xff]
  %v55 = vld [vmem:[%s1 + $0x18] sm:$0xff]
  %v56 = vld [vmem:[%s1 + $0x20] sm:$0xff]
  %v57 = vld [vmem:[%s1 + $0x28] sm:$0xff]
  %v58 = vld [vmem:[%s1 + $0x30] sm:$0xff]
  %v59 = vld [vmem:[%s1 + $0x38] sm:$0xff]
  %v60 = vld [vmem:[%s1 + $0x40] sm:$0xff]
  %v61 = vld [vmem:[%s1 + $0x48] sm:$0xff]
  %v62 = vld [vmem:[%s1 + $0x50] sm:$0xff]
  %v63 = vld [vmem:[%s1 + $0x58] sm:$0xff]
  %v64 = vld [vmem:[%s1 + $0x60] sm:$0xff]
  %v65 = vld [vmem:[%s1 + $0x68] sm:$0xff]
  %v66 = vld [vmem:[%s1 + $0x70] sm:$0xff]
  %v67 = vld [vmem:[%s1 + $0x78] sm:$0xff]
  %v68 = vld [vmem:[%s2] sm:$0x1]
  %v70 = vlaneseq
  %v71 = vshrl.u32 %v70, 7
  %v72 = vsub.s32 0, %v71
  %v73 = vrot.slane %v68, %v72
  %75 = vmatprep.subr.mxu0 0.0
  %76 = vmatpush1.msra.mxu0 %v52
  %77 = vmatprep.subr.mxu0 0.0
  %78 = vmatpush1.msra.mxu0 %v53
  %79 = vmatprep.subr.mxu0 0.0
  %80 = vmatpush1.msra.mxu0 %v54
  %81 = vmatprep.subr.mxu0 0.0
  %82 = vmatpush1.msra.mxu0 %v55
  %83 = vmatprep.subr.mxu0 0.0
  %84 = vmatpush1.msra.mxu0 %v56
  %85 = vmatprep.subr.mxu0 0.0
  %86 = vmatpush1.msra.mxu0 %v57
  %87 = vmatprep.subr.mxu0 0.0
  %88 = vmatpush1.msra.mxu0 %v58
  %89 = vmatprep.subr.mxu0 0.0
  %90 = vmatpush1.msra.mxu0 %v59
  %91 = vmatprep.subr.mxu0 0.0
  %92 = vmatpush1.msra.mxu0 %v60
  %93 = vmatprep.subr.mxu0 0.0
  %94 = vmatpush1.msra.mxu0 %v61
  %95 = vmatprep.subr.mxu0 0.0
  %96 = vmatpush1.msra.mxu0 %v62
  %97 = vmatprep.subr.mxu0 0.0
  %98 = vmatpush1.msra.mxu0 %v63
  %99 = vmatprep.subr.mxu0 0.0
  %100 = vmatpush1.msra.mxu0 %v64
  %101 = vmatprep.subr.mxu0 0.0
  %102 = vmatpush1.msra.mxu0 %v65
  %103 = vmatprep.subr.mxu0 0.0
  %104 = vmatpush1.msra.mxu0 %v66
  %105 = vmatprep.subr.mxu0 0.0
  %106 = vmatpush1.msra.mxu0 %v67
  %107 = vmatprep.subr.mxu0 0.0
  %108 = vmatpush1.msra.mxu0 0.0
  %109 = vmatprep.subr.mxu0 0.0
  %110 = vmatpush1.msra.mxu0 0.0
  %111 = vmatprep.subr.mxu0 0.0
  %112 = vmatpush1.msra.mxu0 0.0
  %113 = vmatprep.subr.mxu0 0.0
  %114 = vmatpush1.msra.mxu0 0.0
  %115 = vmatprep.subr.mxu0 0.0
  %116 = vmatpush1.msra.mxu0 0.0
  %117 = vmatprep.subr.mxu0 0.0
  %118 = vmatpush1.msra.mxu0 0.0
  %119 = vmatprep.subr.mxu0 0.0
  %120 = vmatpush1.msra.mxu0 0.0
  %121 = vmatprep.subr.mxu0 0.0
  %122 = vmatpush1.msra.mxu0 0.0
  %123 = vmatprep.subr.mxu0 0.0
  %124 = vmatpush1.msra.mxu0 0.0
  %125 = vmatprep.subr.mxu0 0.0
  %126 = vmatpush1.msra.mxu0 0.0
  %127 = vmatprep.subr.mxu0 0.0
  %128 = vmatpush1.msra.mxu0 0.0
  %129 = vmatprep.subr.mxu0 0.0
  %130 = vmatpush1.msra.mxu0 0.0
  %131 = vmatprep.subr.mxu0 0.0
  %132 = vmatpush1.msra.mxu0 0.0
  %133 = vmatprep.subr.mxu0 0.0
  %134 = vmatpush1.msra.mxu0 0.0
  %135 = vmatprep.subr.mxu0 0.0
  %136 = vmatpush1.msra.mxu0 0.0
  %137 = vmatprep.subr.mxu0 0.0
  %138 = vmatpush1.msra.mxu0 0.0
  %139 = vmatprep.mubr.f32.mxu0 0.0
  %140 = vmatmul.mubr.f32.gmra.mrb[0].mxu0 %v20
  %v141 = vpop.f32.mrb[0].mxu0
  %v142 = vadd.f32 %v73, %v141
  %v143 = vpop.f32.mrb[0].mxu0
  %144 = vmatprep.mubr.f32.mxu0 0.0
  %145 = vmatmul.mubr.f32.gmra.mrb[0].mxu0 %v21
  %v146 = vpop.f32.mrb[0].mxu0
  %v147 = vadd.f32 %v73, %v146
  %v148 = vpop.f32.mrb[0].mxu0
  %149 = vmatprep.mubr.f32.mxu0 0.0
  %150 = vmatmul.mubr.f32.gmra.mrb[0].mxu0 %v22
  %v151 = vpop.f32.mrb[0].mxu0
  %v152 = vadd.f32 %v73, %v151
  %v153 = vpop.f32.mrb[0].mxu0
  %154 = vmatprep.mubr.f32.mxu0 0.0
  %155 = vmatmul.mubr.f32.gmra.mrb[0].mxu0 %v23
  %v156 = vpop.f32.mrb[0].mxu0
  %v157 = vadd.f32 %v73, %v156
  %v158 = vpop.f32.mrb[0].mxu0
  %159 = vmatprep.mubr.f32.mxu0 0.0
  %160 = vmatmul.mubr.f32.gmra.mrb[0].mxu0 %v24
  %v161 = vpop.f32.mrb[0].mxu0
  %v162 = vadd.f32 %v73, %v161
  %v163 = vpop.f32.mrb[0].mxu0
  %164 = vmatprep.mubr.f32.mxu0 0.0
  %165 = vmatmul.mubr.f32.gmra.mrb[0].mxu0 %v25
  %v166 = vpop.f32.mrb[0].mxu0
  %v167 = vadd.f32 %v73, %v166
  %v168 = vpop.f32.mrb[0].mxu0
  %169 = vmatprep.mubr.f32.mxu0 0.0
  %170 = vmatmul.mubr.f32.gmra.mrb[0].mxu0 %v26
  %v171 = vpop.f32.mrb[0].mxu0
  %v172 = vadd.f32 %v73, %v171
  %v173 = vpop.f32.mrb[0].mxu0
  %174 = vmatprep.mubr.f32.mxu0 0.0
  %175 = vmatmul.mubr.f32.gmra.mrb[0].mxu0 %v27
  %v176 = vpop.f32.mrb[0].mxu0
  %v177 = vadd.f32 %v73, %v176
  %v178 = vpop.f32.mrb[0].mxu0
  %179 = vmatprep.mubr.f32.mxu0 0.0
  %180 = vmatmul.mubr.f32.gmra.mrb[0].mxu0 %v28
  %v181 = vpop.f32.mrb[0].mxu0
  %v182 = vadd.f32 %v73, %v181
  %v183 = vpop.f32.mrb[0].mxu0
  %184 = vmatprep.mubr.f32.mxu0 0.0
  %185 = vmatmul.mubr.f32.gmra.mrb[0].mxu0 %v29
  %v186 = vpop.f32.mrb[0].mxu0
  %v187 = vadd.f32 %v73, %v186
  %v188 = vpop.f32.mrb[0].mxu0
  %189 = vmatprep.mubr.f32.mxu0 0.0
  %190 = vmatmul.mubr.f32.gmra.mrb[0].mxu0 %v30
  %v191 = vpop.f32.mrb[0].mxu0
  %v192 = vadd.f32 %v73, %v191
  %v193 = vpop.f32.mrb[0].mxu0
  %194 = vmatprep.mubr.f32.mxu0 0.0
  %195 = vmatmul.mubr.f32.gmra.mrb[0].mxu0 %v31
  %v196 = vpop.f32.mrb[0].mxu0
  %v197 = vadd.f32 %v73, %v196
  %v198 = vpop.f32.mrb[0].mxu0
  %199 = vmatprep.mubr.f32.mxu0 0.0
  %200 = vmatmul.mubr.f32.gmra.mrb[0].mxu0 %v32
  %v201 = vpop.f32.mrb[0].mxu0
  %v202 = vadd.f32 %v73, %v201
  %v203 = vpop.f32.mrb[0].mxu0
  %204 = vmatprep.mubr.f32.mxu0 0.0
  %205 = vmatmul.mubr.f32.gmra.mrb[0].mxu0 %v33
  %v206 = vpop.f32.mrb[0].mxu0
  %v207 = vadd.f32 %v73, %v206
  %v208 = vpop.f32.mrb[0].mxu0
  %209 = vmatprep.mubr.f32.mxu0 0.0
  %210 = vmatmul.mubr.f32.gmra.mrb[0].mxu0 %v34
  %v211 = vpop.f32.mrb[0].mxu0
  %v212 = vadd.f32 %v73, %v211
  %v213 = vpop.f32.mrb[0].mxu0
  %214 = vmatprep.mubr.f32.mxu0 0.0
  %215 = vmatmul.mubr.f32.gmra.mrb[0].mxu0 %v35
  %v216 = vpop.f32.mrb[0].mxu0
  %v217 = vadd.f32 %v73, %v216
  %v218 = vpop.f32.mrb[0].mxu0
  %219 = vmatprep.mubr.f32.mxu0 0.0
  %220 = vmatmul.mubr.f32.gmra.mrb[0].mxu0 %v36
  %v221 = vpop.f32.mrb[0].mxu0
  %v222 = vadd.f32 %v73, %v221
  %v223 = vpop.f32.mrb[0].mxu0
  %224 = vmatprep.mubr.f32.mxu0 0.0
  %225 = vmatmul.mubr.f32.gmra.mrb[0].mxu0 %v37
  %v226 = vpop.f32.mrb[0].mxu0
  %v227 = vadd.f32 %v73, %v226
  %v228 = vpop.f32.mrb[0].mxu0
  %229 = vmatprep.mubr.f32.mxu0 0.0
  %230 = vmatmul.mubr.f32.gmra.mrb[0].mxu0 %v38
  %v231 = vpop.f32.mrb[0].mxu0
  %v232 = vadd.f32 %v73, %v231
  %v233 = vpop.f32.mrb[0].mxu0
  %234 = vmatprep.mubr.f32.mxu0 0.0
  %235 = vmatmul.mubr.f32.gmra.mrb[0].mxu0 %v39
  %v236 = vpop.f32.mrb[0].mxu0
  %v237 = vadd.f32 %v73, %v236
  %v238 = vpop.f32.mrb[0].mxu0
  %239 = vmatprep.mubr.f32.mxu0 0.0
  %240 = vmatmul.mubr.f32.gmra.mrb[0].mxu0 %v40
  %v241 = vpop.f32.mrb[0].mxu0
  %v242 = vadd.f32 %v73, %v241
  %v243 = vpop.f32.mrb[0].mxu0
  %244 = vmatprep.mubr.f32.mxu0 0.0
  %245 = vmatmul.mubr.f32.gmra.mrb[0].mxu0 %v41
  %v246 = vpop.f32.mrb[0].mxu0
  %v247 = vadd.f32 %v73, %v246
  %v248 = vpop.f32.mrb[0].mxu0
  %249 = vmatprep.mubr.f32.mxu0 0.0
  %250 = vmatmul.mubr.f32.gmra.mrb[0].mxu0 %v42
  %v251 = vpop.f32.mrb[0].mxu0
  %v252 = vadd.f32 %v73, %v251
  %v253 = vpop.f32.mrb[0].mxu0
  %254 = vmatprep.mubr.f32.mxu0 0.0
  %255 = vmatmul.mubr.f32.gmra.mrb[0].mxu0 %v43
  %v256 = vpop.f32.mrb[0].mxu0
  %v257 = vadd.f32 %v73, %v256
  %v258 = vpop.f32.mrb[0].mxu0
  %259 = vmatprep.mubr.f32.mxu0 0.0
  %260 = vmatmul.mubr.f32.gmra.mrb[0].mxu0 %v44
  %v261 = vpop.f32.mrb[0].mxu0
  %v262 = vadd.f32 %v73, %v261
  %v263 = vpop.f32.mrb[0].mxu0
  %264 = vmatprep.mubr.f32.mxu0 0.0
  %265 = vmatmul.mubr.f32.gmra.mrb[0].mxu0 %v45
  %v266 = vpop.f32.mrb[0].mxu0
  %v267 = vadd.f32 %v73, %v266
  %v268 = vpop.f32.mrb[0].mxu0
  %269 = vmatprep.mubr.f32.mxu0 0.0
  %270 = vmatmul.mubr.f32.gmra.mrb[0].mxu0 %v46
  %v271 = vpop.f32.mrb[0].mxu0
  %v272 = vadd.f32 %v73, %v271
  %v273 = vpop.f32.mrb[0].mxu0
  %274 = vmatprep.mubr.f32.mxu0 0.0
  %275 = vmatmul.mubr.f32.gmra.mrb[0].mxu0 %v47
  %v276 = vpop.f32.mrb[0].mxu0
  %v277 = vadd.f32 %v73, %v276
  %v278 = vpop.f32.mrb[0].mxu0
  %279 = vmatprep.mubr.f32.mxu0 0.0
  %280 = vmatmul.mubr.f32.gmra.mrb[0].mxu0 %v48
  %v281 = vpop.f32.mrb[0].mxu0
  %v282 = vadd.f32 %v73, %v281
  %v283 = vpop.f32.mrb[0].mxu0
  %284 = vmatprep.mubr.f32.mxu0 0.0
  %285 = vmatmul.mubr.f32.gmra.mrb[0].mxu0 %v49
  %v286 = vpop.f32.mrb[0].mxu0
  %v287 = vadd.f32 %v73, %v286
  %v288 = vpop.f32.mrb[0].mxu0
  %289 = vmatprep.mubr.f32.mxu0 0.0
  %290 = vmatmul.mubr.f32.gmra.mrb[0].mxu0 %v50
  %v291 = vpop.f32.mrb[0].mxu0
  %v292 = vadd.f32 %v73, %v291
  %v293 = vpop.f32.mrb[0].mxu0
  %294 = vmatprep.mubr.f32.mxu0 0.0
  %295 = vmatmul.mubr.f32.gmra.mrb[0].mxu0 %v51
  %v296 = vpop.f32.mrb[0].mxu0
  %v297 = vadd.f32 %v73, %v296
  %v298 = vpop.f32.mrb[0].mxu0
  %299 = vdwg.mxu0
  %v300 = vmax.f32 %v142, 0.0
  %v301 = vmax.f32 %v147, 0.0
  %v302 = vmax.f32 %v152, 0.0
  %v303 = vmax.f32 %v157, 0.0
  %v304 = vmax.f32 %v162, 0.0
  %v305 = vmax.f32 %v167, 0.0
  %v306 = vmax.f32 %v172, 0.0
  %v307 = vmax.f32 %v177, 0.0
  %v308 = vmax.f32 %v182, 0.0
  %v309 = vmax.f32 %v187, 0.0
  %v310 = vmax.f32 %v192, 0.0
  %v311 = vmax.f32 %v197, 0.0
  %v312 = vmax.f32 %v202, 0.0
  %v313 = vmax.f32 %v207, 0.0
  %v314 = vmax.f32 %v212, 0.0
  %v315 = vmax.f32 %v217, 0.0
  %v316 = vmax.f32 %v222, 0.0
  %v317 = vmax.f32 %v227, 0.0
  %v318 = vmax.f32 %v232, 0.0
  %v319 = vmax.f32 %v237, 0.0
  %v320 = vmax.f32 %v242, 0.0
  %v321 = vmax.f32 %v247, 0.0
  %v322 = vmax.f32 %v252, 0.0
  %v323 = vmax.f32 %v257, 0.0
  %v324 = vmax.f32 %v262, 0.0
  %v325 = vmax.f32 %v267, 0.0
  %v326 = vmax.f32 %v272, 0.0
  %v327 = vmax.f32 %v277, 0.0
  %v328 = vmax.f32 %v282, 0.0
  %v329 = vmax.f32 %v287, 0.0
  %v330 = vmax.f32 %v292, 0.0
  %v331 = vmax.f32 %v297, 0.0
  %v332 = vld [vmem:[%s3] sm:$0xff]
  %v333 = vld [vmem:[%s3 + $0x8] sm:$0xff]
  %v334 = vld [vmem:[%s3 + $0x10] sm:$0xff]
  %v335 = vld [vmem:[%s3 + $0x18] sm:$0xff]
  %v336 = vld [vmem:[%s3 + $0x20] sm:$0xff]
  %v337 = vld [vmem:[%s3 + $0x28] sm:$0xff]
  %v338 = vld [vmem:[%s3 + $0x30] sm:$0xff]
  %v339 = vld [vmem:[%s3 + $0x38] sm:$0xff]
  %v340 = vld [vmem:[%s3 + $0x40] sm:$0xff]
  %v341 = vld [vmem:[%s3 + $0x48] sm:$0xff]
  %v342 = vld [vmem:[%s3 + $0x50] sm:$0xff]
  %v343 = vld [vmem:[%s3 + $0x58] sm:$0xff]
  %v344 = vld [vmem:[%s3 + $0x60] sm:$0xff]
  %v345 = vld [vmem:[%s3 + $0x68] sm:$0xff]
  %v346 = vld [vmem:[%s3 + $0x70] sm:$0xff]
  %v347 = vld [vmem:[%s3 + $0x78] sm:$0xff]
  %v348 = vld [vmem:[%s4] sm:$0x1]
  %v350 = vlaneseq
  %v351 = vshrl.u32 %v350, 7
  %v352 = vsub.s32 0, %v351
  %v353 = vrot.slane %v348, %v352
  %355 = vmatprep.subr.mxu0 0.0
  %356 = vmatpush1.msra.mxu0 %v332
  %357 = vmatprep.subr.mxu0 0.0
  %358 = vmatpush1.msra.mxu0 %v333
  %359 = vmatprep.subr.mxu0 0.0
  %360 = vmatpush1.msra.mxu0 %v334
  %361 = vmatprep.subr.mxu0 0.0
  %362 = vmatpush1.msra.mxu0 %v335
  %363 = vmatprep.subr.mxu0 0.0
  %364 = vmatpush1.msra.mxu0 %v336
  %365 = vmatprep.subr.mxu0 0.0
  %366 = vmatpush1.msra.mxu0 %v337
  %367 = vmatprep.subr.mxu0 0.0
  %368 = vmatpush1.msra.mxu0 %v338
  %369 = vmatprep.subr.mxu0 0.0
  %370 = vmatpush1.msra.mxu0 %v339
  %371 = vmatprep.subr.mxu0 0.0
  %372 = vmatpush1.msra.mxu0 %v340
  %373 = vmatprep.subr.mxu0 0.0
  %374 = vmatpush1.msra.mxu0 %v341
  %375 = vmatprep.subr.mxu0 0.0
  %376 = vmatpush1.msra.mxu0 %v342
  %377 = vmatprep.subr.mxu0 0.0
  %378 = vmatpush1.msra.mxu0 %v343
  %379 = vmatprep.subr.mxu0 0.0
  %380 = vmatpush1.msra.mxu0 %v344
  %381 = vmatprep.subr.mxu0 0.0
  %382 = vmatpush1.msra.mxu0 %v345
  %383 = vmatprep.subr.mxu0 0.0
  %384 = vmatpush1.msra.mxu0 %v346
  %385 = vmatprep.subr.mxu0 0.0
  %386 = vmatpush1.msra.mxu0 %v347
  %387 = vmatprep.subr.mxu0 0.0
  %388 = vmatpush1.msra.mxu0 0.0
  %389 = vmatprep.subr.mxu0 0.0
  %390 = vmatpush1.msra.mxu0 0.0
  %391 = vmatprep.subr.mxu0 0.0
  %392 = vmatpush1.msra.mxu0 0.0
  %393 = vmatprep.subr.mxu0 0.0
  %394 = vmatpush1.msra.mxu0 0.0
  %395 = vmatprep.subr.mxu0 0.0
  %396 = vmatpush1.msra.mxu0 0.0
  %397 = vmatprep.subr.mxu0 0.0
  %398 = vmatpush1.msra.mxu0 0.0
  %399 = vmatprep.subr.mxu0 0.0
  %400 = vmatpush1.msra.mxu0 0.0
  %401 = vmatprep.subr.mxu0 0.0
  %402 = vmatpush1.msra.mxu0 0.0
  %403 = vmatprep.subr.mxu0 0.0
  %404 = vmatpush1.msra.mxu0 0.0
  %405 = vmatprep.subr.mxu0 0.0
  %406 = vmatpush1.msra.mxu0 0.0
  %407 = vmatprep.subr.mxu0 0.0
  %408 = vmatpush1.msra.mxu0 0.0
  %409 = vmatprep.subr.mxu0 0.0
  %410 = vmatpush1.msra.mxu0 0.0
  %411 = vmatprep.subr.mxu0 0.0
  %412 = vmatpush1.msra.mxu0 0.0
  %413 = vmatprep.subr.mxu0 0.0
  %414 = vmatpush1.msra.mxu0 0.0
  %415 = vmatprep.subr.mxu0 0.0
  %416 = vmatpush1.msra.mxu0 0.0
  %417 = vmatprep.subr.mxu0 0.0
  %418 = vmatpush1.msra.mxu0 0.0
  %419 = vmatprep.mubr.f32.mxu0 0.0
  %420 = vmatmul.mubr.f32.gmra.mrb[0].mxu0 %v300
  %v421 = vpop.f32.mrb[0].mxu0
  %v422 = vadd.f32 %v353, %v421
  %v423 = vpop.f32.mrb[0].mxu0
  %424 = vmatprep.mubr.f32.mxu0 0.0
  %425 = vmatmul.mubr.f32.gmra.mrb[0].mxu0 %v301
  %v426 = vpop.f32.mrb[0].mxu0
  %v427 = vadd.f32 %v353, %v426
  %v428 = vpop.f32.mrb[0].mxu0
  %429 = vmatprep.mubr.f32.mxu0 0.0
  %430 = vmatmul.mubr.f32.gmra.mrb[0].mxu0 %v302
  %v431 = vpop.f32.mrb[0].mxu0
  %v432 = vadd.f32 %v353, %v431
  %v433 = vpop.f32.mrb[0].mxu0
  %434 = vmatprep.mubr.f32.mxu0 0.0
  %435 = vmatmul.mubr.f32.gmra.mrb[0].mxu0 %v303
  %v436 = vpop.f32.mrb[0].mxu0
  %v437 = vadd.f32 %v353, %v436
  %v438 = vpop.f32.mrb[0].mxu0
  %439 = vmatprep.mubr.f32.mxu0 0.0
  %440 = vmatmul.mubr.f32.gmra.mrb[0].mxu0 %v304
  %v441 = vpop.f32.mrb[0].mxu0
  %v442 = vadd.f32 %v353, %v441
  %v443 = vpop.f32.mrb[0].mxu0
  %444 = vmatprep.mubr.f32.mxu0 0.0
  %445 = vmatmul.mubr.f32.gmra.mrb[0].mxu0 %v305
  %v446 = vpop.f32.mrb[0].mxu0
  %v447 = vadd.f32 %v353, %v446
  %v448 = vpop.f32.mrb[0].mxu0
  %449 = vmatprep.mubr.f32.mxu0 0.0
  %450 = vmatmul.mubr.f32.gmra.mrb[0].mxu0 %v306
  %v451 = vpop.f32.mrb[0].mxu0
  %v452 = vadd.f32 %v353, %v451
  %v453 = vpop.f32.mrb[0].mxu0
  %454 = vmatprep.mubr.f32.mxu0 0.0
  %455 = vmatmul.mubr.f32.gmra.mrb[0].mxu0 %v307
  %v456 = vpop.f32.mrb[0].mxu0
  %v457 = vadd.f32 %v353, %v456
  %v458 = vpop.f32.mrb[0].mxu0
  %459 = vmatprep.mubr.f32.mxu0 0.0
  %460 = vmatmul.mubr.f32.gmra.mrb[0].mxu0 %v308
  %v461 = vpop.f32.mrb[0].mxu0
  %v462 = vadd.f32 %v353, %v461
  %v463 = vpop.f32.mrb[0].mxu0
  %464 = vmatprep.mubr.f32.mxu0 0.0
  %465 = vmatmul.mubr.f32.gmra.mrb[0].mxu0 %v309
  %v466 = vpop.f32.mrb[0].mxu0
  %v467 = vadd.f32 %v353, %v466
  %v468 = vpop.f32.mrb[0].mxu0
  %469 = vmatprep.mubr.f32.mxu0 0.0
  %470 = vmatmul.mubr.f32.gmra.mrb[0].mxu0 %v310
  %v471 = vpop.f32.mrb[0].mxu0
  %v472 = vadd.f32 %v353, %v471
  %v473 = vpop.f32.mrb[0].mxu0
  %474 = vmatprep.mubr.f32.mxu0 0.0
  %475 = vmatmul.mubr.f32.gmra.mrb[0].mxu0 %v311
  %v476 = vpop.f32.mrb[0].mxu0
  %v477 = vadd.f32 %v353, %v476
  %v478 = vpop.f32.mrb[0].mxu0
  %479 = vmatprep.mubr.f32.mxu0 0.0
  %480 = vmatmul.mubr.f32.gmra.mrb[0].mxu0 %v312
  %v481 = vpop.f32.mrb[0].mxu0
  %v482 = vadd.f32 %v353, %v481
  %v483 = vpop.f32.mrb[0].mxu0
  %484 = vmatprep.mubr.f32.mxu0 0.0
  %485 = vmatmul.mubr.f32.gmra.mrb[0].mxu0 %v313
  %v486 = vpop.f32.mrb[0].mxu0
  %v487 = vadd.f32 %v353, %v486
  %v488 = vpop.f32.mrb[0].mxu0
  %489 = vmatprep.mubr.f32.mxu0 0.0
  %490 = vmatmul.mubr.f32.gmra.mrb[0].mxu0 %v314
  %v491 = vpop.f32.mrb[0].mxu0
  %v492 = vadd.f32 %v353, %v491
  %v493 = vpop.f32.mrb[0].mxu0
  %494 = vmatprep.mubr.f32.mxu0 0.0
  %495 = vmatmul.mubr.f32.gmra.mrb[0].mxu0 %v315
  %v496 = vpop.f32.mrb[0].mxu0
  %v497 = vadd.f32 %v353, %v496
  %v498 = vpop.f32.mrb[0].mxu0
  %499 = vmatprep.mubr.f32.mxu0 0.0
  %500 = vmatmul.mubr.f32.gmra.mrb[0].mxu0 %v316
  %v501 = vpop.f32.mrb[0].mxu0
  %v502 = vadd.f32 %v353, %v501
  %v503 = vpop.f32.mrb[0].mxu0
  %504 = vmatprep.mubr.f32.mxu0 0.0
  %505 = vmatmul.mubr.f32.gmra.mrb[0].mxu0 %v317
  %v506 = vpop.f32.mrb[0].mxu0
  %v507 = vadd.f32 %v353, %v506
  %v508 = vpop.f32.mrb[0].mxu0
  %509 = vmatprep.mubr.f32.mxu0 0.0
  %510 = vmatmul.mubr.f32.gmra.mrb[0].mxu0 %v318
  %v511 = vpop.f32.mrb[0].mxu0
  %v512 = vadd.f32 %v353, %v511
  %v513 = vpop.f32.mrb[0].mxu0
  %514 = vmatprep.mubr.f32.mxu0 0.0
  %515 = vmatmul.mubr.f32.gmra.mrb[0].mxu0 %v319
  %v516 = vpop.f32.mrb[0].mxu0
  %v517 = vadd.f32 %v353, %v516
  %v518 = vpop.f32.mrb[0].mxu0
  %519 = vmatprep.mubr.f32.mxu0 0.0
  %520 = vmatmul.mubr.f32.gmra.mrb[0].mxu0 %v320
  %v521 = vpop.f32.mrb[0].mxu0
  %v522 = vadd.f32 %v353, %v521
  %v523 = vpop.f32.mrb[0].mxu0
  %524 = vmatprep.mubr.f32.mxu0 0.0
  %525 = vmatmul.mubr.f32.gmra.mrb[0].mxu0 %v321
  %v526 = vpop.f32.mrb[0].mxu0
  %v527 = vadd.f32 %v353, %v526
  %v528 = vpop.f32.mrb[0].mxu0
  %529 = vmatprep.mubr.f32.mxu0 0.0
  %530 = vmatmul.mubr.f32.gmra.mrb[0].mxu0 %v322
  %v531 = vpop.f32.mrb[0].mxu0
  %v532 = vadd.f32 %v353, %v531
  %v533 = vpop.f32.mrb[0].mxu0
  %534 = vmatprep.mubr.f32.mxu0 0.0
  %535 = vmatmul.mubr.f32.gmra.mrb[0].mxu0 %v323
  %v536 = vpop.f32.mrb[0].mxu0
  %v537 = vadd.f32 %v353, %v536
  %v538 = vpop.f32.mrb[0].mxu0
  %539 = vmatprep.mubr.f32.mxu0 0.0
  %540 = vmatmul.mubr.f32.gmra.mrb[0].mxu0 %v324
  %v541 = vpop.f32.mrb[0].mxu0
  %v542 = vadd.f32 %v353, %v541
  %v543 = vpop.f32.mrb[0].mxu0
  %544 = vmatprep.mubr.f32.mxu0 0.0
  %545 = vmatmul.mubr.f32.gmra.mrb[0].mxu0 %v325
  %v546 = vpop.f32.mrb[0].mxu0
  %v547 = vadd.f32 %v353, %v546
  %v548 = vpop.f32.mrb[0].mxu0
  %549 = vmatprep.mubr.f32.mxu0 0.0
  %550 = vmatmul.mubr.f32.gmra.mrb[0].mxu0 %v326
  %v551 = vpop.f32.mrb[0].mxu0
  %v552 = vadd.f32 %v353, %v551
  %v553 = vpop.f32.mrb[0].mxu0
  %554 = vmatprep.mubr.f32.mxu0 0.0
  %555 = vmatmul.mubr.f32.gmra.mrb[0].mxu0 %v327
  %v556 = vpop.f32.mrb[0].mxu0
  %v557 = vadd.f32 %v353, %v556
  %v558 = vpop.f32.mrb[0].mxu0
  %559 = vmatprep.mubr.f32.mxu0 0.0
  %560 = vmatmul.mubr.f32.gmra.mrb[0].mxu0 %v328
  %v561 = vpop.f32.mrb[0].mxu0
  %v562 = vadd.f32 %v353, %v561
  %v563 = vpop.f32.mrb[0].mxu0
  %564 = vmatprep.mubr.f32.mxu0 0.0
  %565 = vmatmul.mubr.f32.gmra.mrb[0].mxu0 %v329
  %v566 = vpop.f32.mrb[0].mxu0
  %v567 = vadd.f32 %v353, %v566
  %v568 = vpop.f32.mrb[0].mxu0
  %569 = vmatprep.mubr.f32.mxu0 0.0
  %570 = vmatmul.mubr.f32.gmra.mrb[0].mxu0 %v330
  %v571 = vpop.f32.mrb[0].mxu0
  %v572 = vadd.f32 %v353, %v571
  %v573 = vpop.f32.mrb[0].mxu0
  %574 = vmatprep.mubr.f32.mxu0 0.0
  %575 = vmatmul.mubr.f32.gmra.mrb[0].mxu0 %v331
  %v576 = vpop.f32.mrb[0].mxu0
  %v577 = vadd.f32 %v353, %v576
  %v578 = vpop.f32.mrb[0].mxu0
  %579 = vdwg.mxu0
  %580 = vst [vmem:[%s5] sm:$0xff] %v422
  %581 = vst [vmem:[%s5 + $0x8] sm:$0xff] %v427
  %582 = vst [vmem:[%s5 + $0x10] sm:$0xff] %v432
  %583 = vst [vmem:[%s5 + $0x18] sm:$0xff] %v437
  %584 = vst [vmem:[%s5 + $0x20] sm:$0xff] %v442
  %585 = vst [vmem:[%s5 + $0x28] sm:$0xff] %v447
  %586 = vst [vmem:[%s5 + $0x30] sm:$0xff] %v452
  %587 = vst [vmem:[%s5 + $0x38] sm:$0xff] %v457
  %588 = vst [vmem:[%s5 + $0x40] sm:$0xff] %v462
  %589 = vst [vmem:[%s5 + $0x48] sm:$0xff] %v467
  %590 = vst [vmem:[%s5 + $0x50] sm:$0xff] %v472
  %591 = vst [vmem:[%s5 + $0x58] sm:$0xff] %v477
  %592 = vst [vmem:[%s5 + $0x60] sm:$0xff] %v482
  %593 = vst [vmem:[%s5 + $0x68] sm:$0xff] %v487
  %594 = vst [vmem:[%s5 + $0x70] sm:$0xff] %v492
  %595 = vst [vmem:[%s5 + $0x78] sm:$0xff] %v497
  %596 = vst [vmem:[%s5 + $0x80] sm:$0xff] %v502
  %597 = vst [vmem:[%s5 + $0x88] sm:$0xff] %v507
  %598 = vst [vmem:[%s5 + $0x90] sm:$0xff] %v512
  %599 = vst [vmem:[%s5 + $0x98] sm:$0xff] %v517
  %600 = vst [vmem:[%s5 + $0xa0] sm:$0xff] %v522
  %601 = vst [vmem:[%s5 + $0xa8] sm:$0xff] %v527
  %602 = vst [vmem:[%s5 + $0xb0] sm:$0xff] %v532
  %603 = vst [vmem:[%s5 + $0xb8] sm:$0xff] %v537
  %604 = vst [vmem:[%s5 + $0xc0] sm:$0xff] %v542
  %605 = vst [vmem:[%s5 + $0xc8] sm:$0xff] %v547
  %606 = vst [vmem:[%s5 + $0xd0] sm:$0xff] %v552
  %607 = vst [vmem:[%s5 + $0xd8] sm:$0xff] %v557
  %608 = vst [vmem:[%s5 + $0xe0] sm:$0xff] %v562
  %609 = vst [vmem:[%s5 + $0xe8] sm:$0xff] %v567
  %610 = vst [vmem:[%s5 + $0xf0] sm:$0xff] %v572
  %611 = vst [vmem:[%s5 + $0xf8] sm:$0xff] %v577
  // Predicated region
  $region22: #{feedforward.1} parent=0 // pred_check
    _
  $region23: #{feedforward.1} parent=0 // pred_check_branch
    %613 = sbr.rel (0) target = $region25
  $region24: #{feedforward.1} parent=0 // pred_region
    _
  $region25: #{feedforward.1} parent=0 // pred_fallthru
    _
  // Predicated region
  $region26: #{feedforward.1} parent=0 // pred_check
    _
  $region27: #{feedforward.1} parent=0 // pred_check_branch
    %615 = sbr.rel (0) target = $region29
  $region28: #{feedforward.1} parent=0 // pred_region
    _
  $region29: #{feedforward.1} parent=0 // pred_fallthru
    _

</llo_original>
